<compile_context>
chip_gen: v7x
topology: tpu7x:2x2x1
jax: 0.10.0
libtpu: 0.0.40
codegen_flags: <defaults>
</compile_context>

<pallas_src>
import functools
import math

import jax
import jax.numpy as jnp
from jax.experimental import pallas as pl
from jax.experimental.pallas import tpu as pltpu


# ----------------------------- helpers ------------------------------------ #

def _gelu_exact(x):
    # PyTorch nn.GELU() default = exact erf form.
    return 0.5 * x * (1.0 + jax.lax.erf(x * (1.0 / math.sqrt(2.0))))


def _mlp_gate(pooled_2c, w1, b1, w2, b2):
    """Fused dual-pool MLP: (2, C) -> GELU -> (2, C) -> sum rows -> sigmoid -> (1, C)."""
    h = jnp.dot(pooled_2c, w1, preferred_element_type=jnp.float32) + b1   # (2, Chid)
    h = _gelu_exact(h)
    att = jnp.dot(h, w2, preferred_element_type=jnp.float32) + b2        # (2, C)
    return jax.nn.sigmoid(att[0:1, :] + att[1:2, :])                     # (1, C)


def _is_v7x():
    try:
        return "v7" in jax.devices()[0].device_kind.lower()
    except Exception:
        return False


def _choose_hw_block(C, HW, max_block_bytes):
    """Lane-dense (multiple of 128) spatial block bounded by max_block_bytes."""
    lane_full = ((HW + 127) // 128) * 128
    cap = max(128, (max_block_bytes // (C * 4)) // 128 * 128)
    return min(lane_full, cap)


# --------------------------- fused fast path ------------------------------ #

def _fused_cbam_kernel(x_ref, w1_ref, b1_ref, w2_ref, b2_ref, o_ref, stat_ref,
                       *, hw_true):
    """grid=(B,): one pass over the per-batch slab -> pool -> MLP -> gate -> out."""
    x = x_ref[...]                                               # (1, C, HW)
    stat_ref[0:1, :] = jnp.sum(x, axis=-1) * jnp.float32(1.0 / hw_true)   # avg
    stat_ref[1:2, :] = jnp.max(x, axis=-1)                                # max
    gate = _mlp_gate(stat_ref[...], w1_ref[...], b1_ref[...],
                     w2_ref[...], b2_ref[...])                   # (1, C)
    o_ref[...] = x * gate[:, :, None]


# ------------------------- streaming fallback ------------------------------ #

def _pool_gate_kernel(x_ref, w1_ref, b1_ref, w2_ref, b2_ref, gate_ref, stat_ref,
                      *, inv_hw, valid_in_last, ragged):
    """Phase 1: stream spatial tiles, accumulate sum+max, finalize fused MLP."""
    k = pl.program_id(1)
    C = x_ref.shape[1]

    @pl.when(k == 0)
    def _init():
        stat_ref[0:1, :] = jnp.zeros((1, C), jnp.float32)              # running sum
        stat_ref[1:2, :] = jnp.full((1, C), -jnp.inf, jnp.float32)     # running max

    x = x_ref[...]                                                     # (1, C, hw_blk)

    if ragged:
        is_last = k == pl.num_programs(1) - 1

        @pl.when(jnp.logical_not(is_last))
        def _full_tile():
            stat_ref[0:1, :] += jnp.sum(x, axis=-1)
            stat_ref[1:2, :] = jnp.maximum(stat_ref[1:2, :], jnp.max(x, axis=-1))

        @pl.when(is_last)
        def _tail_tile():
            # OOB lanes of a partial block are undefined: mask to 0 for the sum
            # and -inf for the max (static lane count; only this tile pays it).
            lane = jax.lax.broadcasted_iota(jnp.int32, x.shape, 2)
            valid = lane < valid_in_last
            stat_ref[0:1, :] += jnp.sum(jnp.where(valid, x, 0.0), axis=-1)
            stat_ref[1:2, :] = jnp.maximum(
                stat_ref[1:2, :],
                jnp.max(jnp.where(valid, x, -jnp.inf), axis=-1))
    else:
        stat_ref[0:1, :] += jnp.sum(x, axis=-1)
        stat_ref[1:2, :] = jnp.maximum(stat_ref[1:2, :], jnp.max(x, axis=-1))

    @pl.when(k == pl.num_programs(1) - 1)
    def _finalize():
        # row 0 -> avg (scale by 1/HW), row 1 -> max (scale by 1).
        row = jax.lax.broadcasted_iota(jnp.int32, (2, 1), 0)
        scale = jnp.where(row == 0, jnp.float32(inv_hw), jnp.float32(1.0))
        pooled = stat_ref[...] * scale                                  # (2, C)
        gate_ref[...] = _mlp_gate(pooled, w1_ref[...], b1_ref[...],
                                  w2_ref[...], b2_ref[...])             # (1, C)


def _apply_gate_kernel(x_ref, gate_ref, o_ref):
    """Phase 2: stream x and multiply by the per-(b, C) gate."""
    gate = gate_ref[...]                         # (1, C) — broadcast hoisted per tile
    o_ref[...] = x_ref[...] * gate[:, :, None]   # (1, C, hw_blk)


# ------------------------------ wrapper ------------------------------------ #

def _cbam_forward_impl(x_nchw, w1, b1, w2, b2, *, force_streaming=False,
                       stream_block_bytes=None):
    """x_nchw: (B, C, H, W) float32. Returns (B, C, H, W) float32."""
    B, C, H, W = x_nchw.shape
    HW = H * W
    Chid = w1.shape[1]
    x3 = x_nchw.reshape(B, C, HW)

    v7 = _is_v7x()
    # Physical-VMEM-aware caps: v7x has 64 MiB per TC, v5e/v6e have 128 MiB.
    fused_cap = (56 if v7 else 100) * 1024 * 1024
    if stream_block_bytes is None:
        stream_block_bytes = (4 if v7 else 8) * 1024 * 1024
    stream_vmem = (32 if v7 else 64) * 1024 * 1024

    # v7x: actually split the batch axis across the 2 TensorCores.
    batch_sem = pltpu.CORE_PARALLEL if (v7 and B % 2 == 0) else pltpu.PARALLEL

    const = lambda *_: (0, 0)

    # VMEM need of the fused path: in + out slabs, double-buffered, + weights.
    c_pad = ((C + 7) // 8) * 8
    hw_lane = ((HW + 127) // 128) * 128
    slab_pad_bytes = c_pad * hw_lane * 4
    w_bytes = 4 * (2 * C * Chid + Chid + C)
    fused_vmem_needed = 4 * slab_pad_bytes + 2 * w_bytes + (1 << 20)

    if (not force_streaming) and fused_vmem_needed <= fused_cap:
        # ---- Fused single-pass path: pool + MLP + gate-apply per batch ----
        out3 = pl.pallas_call(
            functools.partial(_fused_cbam_kernel, hw_true=HW),
            out_shape=jax.ShapeDtypeStruct((B, C, HW), jnp.float32),
            grid_spec=pltpu.PrefetchScalarGridSpec(
                num_scalar_prefetch=0,
                grid=(B,),
                in_specs=[
                    pl.BlockSpec((1, C, HW), lambda b: (b, 0, 0)),
                    pl.BlockSpec((C, Chid), const),
                    pl.BlockSpec((1, Chid), const),
                    pl.BlockSpec((Chid, C), const),
                    pl.BlockSpec((1, C), const),
                ],
                out_specs=pl.BlockSpec((1, C, HW), lambda b: (b, 0, 0)),
                scratch_shapes=[pltpu.VMEM((2, C), jnp.float32)],
            ),
            compiler_params=pltpu.CompilerParams(
                dimension_semantics=(batch_sem,),
                vmem_limit_bytes=min(fused_cap,
                                     max(fused_vmem_needed, 32 * 1024 * 1024))),
            cost_estimate=pl.CostEstimate(
                flops=3 * B * C * HW + 8 * B * C * Chid,
                transcendentals=B * (2 * Chid + C),
                bytes_accessed=4 * (2 * B * C * HW + 2 * C * Chid + Chid + C)),
        )(x3, w1, b1, w2, b2)
        return out3.reshape(B, C, H, W)

    # ---- Streaming fallback (HW too large for a per-batch slab in VMEM) ----
    hw_blk = _choose_hw_block(C, HW, stream_block_bytes)
    n_hw = pl.cdiv(HW, hw_blk)
    valid_in_last = HW - (n_hw - 1) * hw_blk
    ragged = valid_in_last != hw_blk

    # Phase 1: pooled stats -> fused MLP -> sigmoid gate (B, C).
    gate = pl.pallas_call(
        functools.partial(_pool_gate_kernel, inv_hw=1.0 / HW,
                          valid_in_last=valid_in_last, ragged=ragged),
        out_shape=jax.ShapeDtypeStruct((B, C), jnp.float32),
        grid_spec=pltpu.PrefetchScalarGridSpec(
            num_scalar_prefetch=0,
            grid=(B, n_hw),
            in_specs=[
                pl.BlockSpec((1, C, hw_blk), lambda b, k: (b, 0, k)),
                pl.BlockSpec((C, Chid), const),
                pl.BlockSpec((1, Chid), const),
                pl.BlockSpec((Chid, C), const),
                pl.BlockSpec((1, C), const),
            ],
            out_specs=pl.BlockSpec((1, C), lambda b, k: (b, 0)),
            scratch_shapes=[pltpu.VMEM((2, C), jnp.float32)],
        ),
        compiler_params=pltpu.CompilerParams(
            dimension_semantics=(batch_sem, pltpu.ARBITRARY),
            vmem_limit_bytes=stream_vmem),
        cost_estimate=pl.CostEstimate(
            flops=2 * B * C * HW + 8 * B * C * Chid,
            transcendentals=B * (2 * Chid + C),
            bytes_accessed=4 * (B * C * HW + B * C + 2 * C * Chid + Chid + C)),
    )(x3, w1, b1, w2, b2)

    # Phase 2: stream x again and apply the gate (partial last block is
    # masked on writeback by Pallas, so no wrapper-side pad/slice needed).
    out3 = pl.pallas_call(
        _apply_gate_kernel,
        out_shape=jax.ShapeDtypeStruct((B, C, HW), jnp.float32),
        grid_spec=pltpu.PrefetchScalarGridSpec(
            num_scalar_prefetch=0,
            grid=(B, n_hw),
            in_specs=[
                pl.BlockSpec((1, C, hw_blk), lambda b, k: (b, 0, k)),
                pl.BlockSpec((1, C), lambda b, k: (b, 0)),
            ],
            out_specs=pl.BlockSpec((1, C, hw_blk), lambda b, k: (b, 0, k)),
        ),
        compiler_params=pltpu.CompilerParams(
            dimension_semantics=(batch_sem, pltpu.PARALLEL),
            vmem_limit_bytes=stream_vmem),
        cost_estimate=pl.CostEstimate(
            flops=B * C * HW,
            transcendentals=0,
            bytes_accessed=4 * (2 * B * C * HW + B * C)),
    )(x3, gate)

    return out3.reshape(B, C, H, W)


cbam_forward = jax.jit(_cbam_forward_impl,
                       static_argnames=("force_streaming", "stream_block_bytes"))


# ------------------------------ reference ---------------------------------- #

def cbam_reference(x_nchw, w1, b1, w2, b2):
    """Pure-JAX reference matching the PyTorch forward (default CBAM args)."""
    B, C, H, W = x_nchw.shape
    xf = x_nchw.reshape(B, C, H * W)
    avg_pool = jnp.mean(xf, axis=-1)          # (B, C)
    max_pool = jnp.max(xf, axis=-1)           # (B, C)

    def mlp(p):
        h = p @ w1 + b1
        h = _gelu_exact(h)
        return h @ w2 + b2

    att = mlp(avg_pool) + mlp(max_pool)
    gate = jax.nn.sigmoid(att)                # (B, C)
    return x_nchw * gate[:, :, None, None]


if __name__ == "__main__":
    # gate_channels must be divisible by reduction_ratio=16 for the MLP.
    B, C = 2, 64
    reduction_ratio = 16
    Chid = C // reduction_ratio

    key = jax.random.PRNGKey(0)
    k_x, k_w1, k_b1, k_w2, k_b2, k_x2 = jax.random.split(key, 6)

    # PyTorch Linear stores (out, in); pre-transposed so kernels do p @ W + b.
    w1 = jax.random.normal(k_w1, (C, Chid), dtype=jnp.float32) * 0.1
    b1 = jax.random.normal(k_b1, (1, Chid), dtype=jnp.float32) * 0.1
    w2 = jax.random.normal(k_w2, (Chid, C), dtype=jnp.float32) * 0.1
    b2 = jax.random.normal(k_b2, (1, C), dtype=jnp.float32) * 0.1

    # 1) Fused single-pass fast path (typical CBAM slab fits VMEM).
    x = jax.random.normal(k_x, (B, C, 8, 8), dtype=jnp.float32)
    out = jax.block_until_ready(cbam_forward(x, w1, b1, w2, b2))
    ref = jax.block_until_ready(cbam_reference(x, w1, b1, w2, b2))
    assert out.shape == x.shape and out.dtype == x.dtype
    assert jnp.allclose(out, ref, atol=1e-5, rtol=1e-5), "fused path mismatch"

    # 2) Streaming fallback (forced, tiny 128-lane blocks) with a ragged last
    #    tile: HW = 400 = 3*128 + 16 exercises the in-kernel tail masking.
    x_big = jax.random.normal(k_x2, (B, C, 20, 20), dtype=jnp.float32)
    out2 = jax.block_until_ready(
        cbam_forward(x_big, w1, b1, w2, b2,
                     force_streaming=True, stream_block_bytes=C * 4 * 128))
    ref2 = jax.block_until_ready(cbam_reference(x_big, w1, b1, w2, b2))
    assert out2.shape == x_big.shape and out2.dtype == x_big.dtype
    assert jnp.allclose(out2, ref2, atol=1e-4, rtol=1e-4), "streaming path mismatch"

    # TODO(synk): SpatialGate (7x7 conv + InstanceNorm), ChannelwiseVariance, and
    # 'lp'/'lse' pool types are not implemented — CBAM defaults (use_spatial=False,
    # use_varmap=False, pool_types=('avg','max')) never exercise them.
    print("KERNEL_OK")
</pallas_src>

<mosaic_0001>
module attributes {stable_mosaic.version = 11 : i64} {
  func.func @_fused_cbam_kernel(%arg0: i32, %arg1: memref<1x64x64xf32, #tpu.memory_space<vmem>>, %arg2: memref<64x4xf32, #tpu.memory_space<vmem>>, %arg3: memref<1x4xf32, #tpu.memory_space<vmem>>, %arg4: memref<4x64xf32, #tpu.memory_space<vmem>>, %arg5: memref<1x64xf32, #tpu.memory_space<vmem>>, %arg6: memref<1x64x64xf32, #tpu.memory_space<vmem>>, %arg7: memref<2x64xf32, #tpu.memory_space<vmem>>) attributes {dimension_semantics = [#tpu.dimension_semantics<parallel>], iteration_bounds = array<i64: 2>, scalar_prefetch = 0 : i64, scratch_operands = 1 : i64, tpu.core_type = #tpu.core_type<tc>, window_params = [{transform_indices = @transform_0, window_bounds = array<i64: 1, 64, 64>}, {pipeline_mode = #tpu.pipeline_mode<synchronous>, transform_indices = @transform_1, window_bounds = array<i64: 64, 4>}, {pipeline_mode = #tpu.pipeline_mode<synchronous>, transform_indices = @transform_2, window_bounds = array<i64: 1, 4>}, {pipeline_mode = #tpu.pipeline_mode<synchronous>, transform_indices = @transform_3, window_bounds = array<i64: 4, 64>}, {pipeline_mode = #tpu.pipeline_mode<synchronous>, transform_indices = @transform_4, window_bounds = array<i64: 1, 64>}, {transform_indices = @transform_5, window_bounds = array<i64: 1, 64, 64>}]} {
    %c0 = arith.constant 0 : index
    %c0_0 = arith.constant 0 : index
    %c0_1 = arith.constant 0 : index
    %0 = vector.load %arg1[%c0, %c0_0, %c0_1] : memref<1x64x64xf32, #tpu.memory_space<vmem>>, vector<1x64x64xf32>
    %cst = arith.constant dense<0.000000e+00> : vector<1x64xf32>
    %1 = vector.multi_reduction <add>, %0, %cst [2] : vector<1x64x64xf32> to vector<1x64xf32>
    %cst_2 = arith.constant 1.562500e-02 : f32
    %2 = vector.broadcast %cst_2 : f32 to vector<1x64xf32>
    %3 = arith.mulf %1, %2 : vector<1x64xf32>
    %c0_3 = arith.constant 0 : index
    %c0_4 = arith.constant 0 : index
    %4 = vector.load %arg7[%c0_3, %c0_4] : memref<2x64xf32, #tpu.memory_space<vmem>>, vector<1x64xf32>
    tpu.vector_store %arg7[%c0_3, %c0_4], %3 {strides = array<i32>} : memref<2x64xf32, #tpu.memory_space<vmem>>, vector<1x64xf32>,
    %cst_5 = arith.constant dense<0xFF800000> : vector<1x64xf32>
    %5 = vector.multi_reduction <maximumf>, %0, %cst_5 [2] : vector<1x64x64xf32> to vector<1x64xf32>
    %c1 = arith.constant 1 : index
    %c0_6 = arith.constant 0 : index
    %6 = vector.load %arg7[%c1, %c0_6] : memref<2x64xf32, #tpu.memory_space<vmem>>, vector<1x64xf32>
    tpu.vector_store %arg7[%c1, %c0_6], %5 {strides = array<i32>} : memref<2x64xf32, #tpu.memory_space<vmem>>, vector<1x64xf32>,
    %c0_7 = arith.constant 0 : index
    %c0_8 = arith.constant 0 : index
    %7 = vector.load %arg7[%c0_7, %c0_8] : memref<2x64xf32, #tpu.memory_space<vmem>>, vector<2x64xf32>
    %c0_9 = arith.constant 0 : index
    %c0_10 = arith.constant 0 : index
    %8 = vector.load %arg2[%c0_9, %c0_10] : memref<64x4xf32, #tpu.memory_space<vmem>>, vector<64x4xf32>
    %c0_11 = arith.constant 0 : index
    %c0_12 = arith.constant 0 : index
    %9 = vector.load %arg3[%c0_11, %c0_12] : memref<1x4xf32, #tpu.memory_space<vmem>>, vector<1x4xf32>
    %c0_13 = arith.constant 0 : index
    %c0_14 = arith.constant 0 : index
    %10 = vector.load %arg4[%c0_13, %c0_14] : memref<4x64xf32, #tpu.memory_space<vmem>>, vector<4x64xf32>
    %c0_15 = arith.constant 0 : index
    %c0_16 = arith.constant 0 : index
    %11 = vector.load %arg5[%c0_15, %c0_16] : memref<1x64xf32, #tpu.memory_space<vmem>>, vector<1x64xf32>
    %cst_17 = arith.constant dense<0.000000e+00> : vector<2x4xf32>
    %12 = tpu.matmul %7, %8, %cst_17 {dimension_numbers = #tpu.dot_dimension_numbers<[1], [0], [0], [1], [0, 0, 1, 1], [], []>} : vector<2x64xf32>, vector<64x4xf32>, vector<2x4xf32> -> vector<2x4xf32>
    %13 = vector.broadcast %9 : vector<1x4xf32> to vector<2x4xf32>
    %14 = arith.addf %12, %13 : vector<2x4xf32>
    %cst_18 = arith.constant 5.000000e-01 : f32
    %15 = vector.broadcast %cst_18 : f32 to vector<2x4xf32>
    %16 = arith.mulf %15, %14 : vector<2x4xf32>
    %cst_19 = arith.constant 0.707106769 : f32
    %17 = vector.broadcast %cst_19 : f32 to vector<2x4xf32>
    %18 = arith.mulf %14, %17 : vector<2x4xf32>
    %19 = math.erf %18 : vector<2x4xf32>
    %cst_20 = arith.constant 1.000000e+00 : f32
    %20 = vector.broadcast %cst_20 : f32 to vector<2x4xf32>
    %21 = arith.addf %20, %19 : vector<2x4xf32>
    %22 = arith.mulf %16, %21 : vector<2x4xf32>
    %cst_21 = arith.constant dense<0.000000e+00> : vector<2x64xf32>
    %23 = tpu.matmul %22, %10, %cst_21 {dimension_numbers = #tpu.dot_dimension_numbers<[1], [0], [0], [1], [0, 0, 1, 1], [], []>} : vector<2x4xf32>, vector<4x64xf32>, vector<2x64xf32> -> vector<2x64xf32>
    %24 = vector.broadcast %11 : vector<1x64xf32> to vector<2x64xf32>
    %25 = arith.addf %23, %24 : vector<2x64xf32>
    %26 = vector.extract_strided_slice %25 {offsets = [0, 0], sizes = [1, 64], strides = [1, 1]} : vector<2x64xf32> to vector<1x64xf32>
    %27 = vector.extract_strided_slice %25 {offsets = [1, 0], sizes = [1, 64], strides = [1, 1]} : vector<2x64xf32> to vector<1x64xf32>
    %28 = arith.addf %26, %27 : vector<1x64xf32>
    %29 = arith.negf %28 : vector<1x64xf32>
    %30 = math.exp %29 : vector<1x64xf32>
    %cst_22 = arith.constant 1.000000e+00 : f32
    %31 = vector.broadcast %cst_22 : f32 to vector<1x64xf32>
    %32 = arith.addf %31, %30 : vector<1x64xf32>
    %33 = arith.divf %31, %32 : vector<1x64xf32>
    %34 = vector.shape_cast %33 : vector<1x64xf32> to vector<1x64x1xf32>
    %35 = vector.broadcast %34 : vector<1x64x1xf32> to vector<1x64x64xf32>
    %36 = arith.mulf %0, %35 : vector<1x64x64xf32>
    %c0_23 = arith.constant 0 : index
    %c0_24 = arith.constant 0 : index
    %c0_25 = arith.constant 0 : index
    %37 = vector.load %arg6[%c0_23, %c0_24, %c0_25] : memref<1x64x64xf32, #tpu.memory_space<vmem>>, vector<1x64x64xf32>
    tpu.vector_store %arg6[%c0_23, %c0_24, %c0_25], %36 {strides = array<i32>} : memref<1x64x64xf32, #tpu.memory_space<vmem>>, vector<1x64x64xf32>,
    return
  }
  func.func @transform_0(%arg0: i32) -> (i32, i32, i32) {
    %c0_i32 = arith.constant 0 : i32
    %c0_i32_0 = arith.constant 0 : i32
    %c0_i32_1 = arith.constant 0 : i32
    return %arg0, %c0_i32, %c0_i32_0 : i32, i32, i32
  }
  func.func @transform_1(%arg0: i32) -> (i32, i32) {
    %c0_i32 = arith.constant 0 : i32
    %c0_i32_0 = arith.constant 0 : i32
    %c0_i32_1 = arith.constant 0 : i32
    return %c0_i32, %c0_i32_0 : i32, i32
  }
  func.func @transform_2(%arg0: i32) -> (i32, i32) {
    %c0_i32 = arith.constant 0 : i32
    %c0_i32_0 = arith.constant 0 : i32
    %c0_i32_1 = arith.constant 0 : i32
    return %c0_i32, %c0_i32_0 : i32, i32
  }
  func.func @transform_3(%arg0: i32) -> (i32, i32) {
    %c0_i32 = arith.constant 0 : i32
    %c0_i32_0 = arith.constant 0 : i32
    %c0_i32_1 = arith.constant 0 : i32
    return %c0_i32, %c0_i32_0 : i32, i32
  }
  func.func @transform_4(%arg0: i32) -> (i32, i32) {
    %c0_i32 = arith.constant 0 : i32
    %c0_i32_0 = arith.constant 0 : i32
    %c0_i32_1 = arith.constant 0 : i32
    return %c0_i32, %c0_i32_0 : i32, i32
  }
  func.func @transform_5(%arg0: i32) -> (i32, i32, i32) {
    %c0_i32 = arith.constant 0 : i32
    %c0_i32_0 = arith.constant 0 : i32
    %c0_i32_1 = arith.constant 0 : i32
    return %arg0, %c0_i32, %c0_i32_0 : i32, i32, i32
  }
}

</mosaic_0001>

<llo_original>
// kernel: _cbam_forward_impl.1
$region0: #{_cbam_forward_impl.1}
  #allocation0 [shape = 'u32[]', space=smem, size = 0x4, offset = 0x4, fixed_abs, tag = 'smem constant byte address 0x4 - core index']
  #allocation1 [shape = 'u32[144,128]{1,0:T(1,128)}', space=vmem, size = 0x12000, scoped, tag = 'internal scratch']
  #allocation2 [shape = 'f32[2,64]{1,0:T(2,128)}', space=vmem, size = 0x400, scoped, tag = 'scratch operand']
  %s0 = inlined_call_operand.vmem [shape: f32[2,64,64], index: 0, kind: input, shape index: {}]
  %s1 = inlined_call_operand.vmem [shape: f32[64,4], index: 1, kind: input, shape index: {}]
  %s2 = inlined_call_operand.vmem [shape: f32[1,4], index: 2, kind: input, shape index: {}]
  %s3 = inlined_call_operand.vmem [shape: f32[4,64], index: 3, kind: input, shape index: {}]
  %s4 = inlined_call_operand.vmem [shape: f32[1,64], index: 4, kind: input, shape index: {}]
  %s5 = inlined_call_operand.vmem [shape: f32[2,64,64], index: 5, kind: output, shape index: {}]
  %s6 = sld [smem:[#allocation0]]
  $region53: #{_cbam_forward_impl.1} parent=0
    _
  %s8 = ssub.s32 1, %s6
  %s9 = scalar_select 0, %s8, %s6
  loop: start=0, step=1, limit=4
  $region2: #{_cbam_forward_impl.1} parent=0 // loop_pre_header
    _
  $region3: #{_cbam_forward_impl.1} parent=0 // loop_header
    %s11 = sphi 0, %s15
    %p12 = scmp.ge.s32.totalorder %s11, 4
    %s21 = sphi 0, %s23
    %s24 = sphi 0, %s21
    %s25 = sphi 0, %s24
    %s41 = sphi 0, %s25
    %s45 = sphi 0, %s45
    %s47 = sphi 0, %s45
    %s48 = sphi 0, %s47
    %s62 = sphi 0, %s48
    %s66 = sphi 0, %s66
    %s68 = sphi 0, %s66
    %s69 = sphi 0, %s68
    %s83 = sphi 0, %s69
    %s87 = sphi 0, %s87
    %s89 = sphi 0, %s87
    %s90 = sphi 0, %s89
    %s104 = sphi 0, %s90
    %s108 = sphi 0, %s108
    %s110 = sphi 0, %s108
    %s111 = sphi 0, %s110
    %s125 = sphi 0, %s111
    %s131 = sphi 0, %s133
    %s134 = sphi 0, %s131
    %s135 = sphi 0, %s134
    %s151 = sphi 0, %s135
  $region4: #{_cbam_forward_impl.1} parent=0 // loop_header_branch
    %14 = sbr.rel (%p12) target = $region8
  $region5: #{_cbam_forward_impl.1} parent=0 // loop_body
    %s16 = ssub.s32 %s11, 1
    %s17 = ssub.s32 %s11, 2
    %s18 = sadd.s32 %s11, 1
    %s19 = ssub.s32 %s11, %s18
    %p20 = scmp.eq.s32.totalorder %s19, 0
    %s22 = sadd.s32 %s21, 1
    %s23 = scalar_select %p20, %s21, %s22
    %p26 = pneg %p20
    %p27 = scmp.eq.s32.totalorder %s11, 1
    %p28 = por %p26, %p27
    %p29 = scmp.ne.s32.totalorder %s21, %s24
    %p30 = scmp.eq.s32.totalorder %s11, 0
    %p31 = por %p29, %p30
    %p32 = scmp.ne.s32.totalorder %s21, %s24
    %p33 = scmp.eq.s32.totalorder %s16, 1
    %p34 = por %p32, %p33
    %p35 = scmp.ne.s32.totalorder %s24, %s25
    %p36 = scmp.eq.s32.totalorder %s16, 0
    %p37 = por %p35, %p36
    %p38 = scmp.ne.s32.totalorder %s24, %s25
    %p39 = scmp.eq.s32.totalorder %s17, 1
    %p40 = por %p38, %p39
    %p42 = scmp.ne.s32.totalorder %s25, %s41
    %p43 = scmp.eq.s32.totalorder %s17, 0
    %p44 = por %p42, %p43
    %s46 = sadd.s32 %s45, 1
    %p49 = scmp.eq.s32.totalorder %s11, 1
    %p50 = scmp.ne.s32.totalorder %s45, %s47
    %p51 = scmp.eq.s32.totalorder %s11, 0
    %p52 = por %p50, %p51
    %p53 = scmp.ne.s32.totalorder %s45, %s47
    %p54 = scmp.eq.s32.totalorder %s16, 1
    %p55 = por %p53, %p54
    %p56 = scmp.ne.s32.totalorder %s47, %s48
    %p57 = scmp.eq.s32.totalorder %s16, 0
    %p58 = por %p56, %p57
    %p59 = scmp.ne.s32.totalorder %s47, %s48
    %p60 = scmp.eq.s32.totalorder %s17, 1
    %p61 = por %p59, %p60
    %p63 = scmp.ne.s32.totalorder %s48, %s62
    %p64 = scmp.eq.s32.totalorder %s17, 0
    %p65 = por %p63, %p64
    %s67 = sadd.s32 %s66, 1
    %p70 = scmp.eq.s32.totalorder %s11, 1
    %p71 = scmp.ne.s32.totalorder %s66, %s68
    %p72 = scmp.eq.s32.totalorder %s11, 0
    %p73 = por %p71, %p72
    %p74 = scmp.ne.s32.totalorder %s66, %s68
    %p75 = scmp.eq.s32.totalorder %s16, 1
    %p76 = por %p74, %p75
    %p77 = scmp.ne.s32.totalorder %s68, %s69
    %p78 = scmp.eq.s32.totalorder %s16, 0
    %p79 = por %p77, %p78
    %p80 = scmp.ne.s32.totalorder %s68, %s69
    %p81 = scmp.eq.s32.totalorder %s17, 1
    %p82 = por %p80, %p81
    %p84 = scmp.ne.s32.totalorder %s69, %s83
    %p85 = scmp.eq.s32.totalorder %s17, 0
    %p86 = por %p84, %p85
    %s88 = sadd.s32 %s87, 1
    %p91 = scmp.eq.s32.totalorder %s11, 1
    %p92 = scmp.ne.s32.totalorder %s87, %s89
    %p93 = scmp.eq.s32.totalorder %s11, 0
    %p94 = por %p92, %p93
    %p95 = scmp.ne.s32.totalorder %s87, %s89
    %p96 = scmp.eq.s32.totalorder %s16, 1
    %p97 = por %p95, %p96
    %p98 = scmp.ne.s32.totalorder %s89, %s90
    %p99 = scmp.eq.s32.totalorder %s16, 0
    %p100 = por %p98, %p99
    %p101 = scmp.ne.s32.totalorder %s89, %s90
    %p102 = scmp.eq.s32.totalorder %s17, 1
    %p103 = por %p101, %p102
    %p105 = scmp.ne.s32.totalorder %s90, %s104
    %p106 = scmp.eq.s32.totalorder %s17, 0
    %p107 = por %p105, %p106
    %s109 = sadd.s32 %s108, 1
    %p112 = scmp.eq.s32.totalorder %s11, 1
    %p113 = scmp.ne.s32.totalorder %s108, %s110
    %p114 = scmp.eq.s32.totalorder %s11, 0
    %p115 = por %p113, %p114
    %p116 = scmp.ne.s32.totalorder %s108, %s110
    %p117 = scmp.eq.s32.totalorder %s16, 1
    %p118 = por %p116, %p117
    %p119 = scmp.ne.s32.totalorder %s110, %s111
    %p120 = scmp.eq.s32.totalorder %s16, 0
    %p121 = por %p119, %p120
    %p122 = scmp.ne.s32.totalorder %s110, %s111
    %p123 = scmp.eq.s32.totalorder %s17, 1
    %p124 = por %p122, %p123
    %p126 = scmp.ne.s32.totalorder %s111, %s125
    %p127 = scmp.eq.s32.totalorder %s17, 0
    %p128 = por %p126, %p127
    %s129 = ssub.s32 %s11, %s18
    %p130 = scmp.eq.s32.totalorder %s129, 0
    %s132 = sadd.s32 %s131, 1
    %s133 = scalar_select %p130, %s131, %s132
    %p136 = pneg %p130
    %p137 = scmp.eq.s32.totalorder %s11, 1
    %p138 = por %p136, %p137
    %p139 = scmp.ne.s32.totalorder %s131, %s134
    %p140 = scmp.eq.s32.totalorder %s11, 0
    %p141 = por %p139, %p140
    %p142 = scmp.ne.s32.totalorder %s131, %s134
    %p143 = scmp.eq.s32.totalorder %s16, 1
    %p144 = por %p142, %p143
    %p145 = scmp.ne.s32.totalorder %s134, %s135
    %p146 = scmp.eq.s32.totalorder %s16, 0
    %p147 = por %p145, %p146
    %p148 = scmp.ne.s32.totalorder %s134, %s135
    %p149 = scmp.eq.s32.totalorder %s17, 1
    %p150 = por %p148, %p149
    %p152 = scmp.ne.s32.totalorder %s135, %s151
    %p153 = scmp.eq.s32.totalorder %s17, 0
    %p154 = por %p152, %p153
    %p155 = scmp.le.s32.totalorder 1, %s11
    %p156 = scmp.lt.s32.totalorder %s11, 3
    %p157 = pnand %p155, %p156
    %p158 = pneg %p157
    // Predicated region
    $region9: #{_cbam_forward_impl.1} parent=5 // pred_check
      _
    $region10: #{_cbam_forward_impl.1} parent=5 // pred_check_branch
      %160 = sbr.rel (%p157) target = $region12
    $region11: #{_cbam_forward_impl.1} parent=5 // pred_region
      %s161 = ssub.s32 %s11, 1
      // Predicated region
      $region13: #{_cbam_forward_impl.1} parent=11 // pred_check
        %p162 = pneg %p58
      $region14: #{_cbam_forward_impl.1} parent=11 // pred_check_branch
        %164 = sbr.rel (%p162) target = $region16
      $region15: #{_cbam_forward_impl.1} parent=11 // pred_region
        _
      $region16: #{_cbam_forward_impl.1} parent=11 // pred_fallthru
        _
      // Predicated region
      $region17: #{_cbam_forward_impl.1} parent=11 // pred_check
        %p165 = pneg %p79
      $region18: #{_cbam_forward_impl.1} parent=11 // pred_check_branch
        %167 = sbr.rel (%p165) target = $region20
      $region19: #{_cbam_forward_impl.1} parent=11 // pred_region
        _
      $region20: #{_cbam_forward_impl.1} parent=11 // pred_fallthru
        _
      // Predicated region
      $region21: #{_cbam_forward_impl.1} parent=11 // pred_check
        %p168 = pneg %p100
      $region22: #{_cbam_forward_impl.1} parent=11 // pred_check_branch
        %170 = sbr.rel (%p168) target = $region24
      $region23: #{_cbam_forward_impl.1} parent=11 // pred_region
        _
      $region24: #{_cbam_forward_impl.1} parent=11 // pred_fallthru
        _
      // Predicated region
      $region25: #{_cbam_forward_impl.1} parent=11 // pred_check
        %p171 = pneg %p121
      $region26: #{_cbam_forward_impl.1} parent=11 // pred_check_branch
        %173 = sbr.rel (%p171) target = $region28
      $region27: #{_cbam_forward_impl.1} parent=11 // pred_region
        _
      $region28: #{_cbam_forward_impl.1} parent=11 // pred_fallthru
        _
    $region12: #{_cbam_forward_impl.1} parent=5 // pred_fallthru
      _
    %p174 = scmp.lt.s32.totalorder %s11, 2
    // Predicated region
    $region29: #{_cbam_forward_impl.1} parent=5 // pred_check
      %p175 = pneg %p174
    $region30: #{_cbam_forward_impl.1} parent=5 // pred_check_branch
      %177 = sbr.rel (%p175) target = $region32
    $region31: #{_cbam_forward_impl.1} parent=5 // pred_region
      // Predicated region
      $region33: #{_cbam_forward_impl.1} parent=31 // pred_check
        %p178 = pneg %p31
      $region34: #{_cbam_forward_impl.1} parent=31 // pred_check_branch
        %180 = sbr.rel (%p178) target = $region36
      $region35: #{_cbam_forward_impl.1} parent=31 // pred_region
        %p181 = scmp.lt.s32.totalorder %s11, 1
        %s182 = scalar_select %p181, %s11, 1
        %s183 = smul.addr %s182, 8
        %s184 = smul.addr %s183, 8
        %s185 = scalar_lea.vmem %s0, %s184
      $region36: #{_cbam_forward_impl.1} parent=31 // pred_fallthru
        _
    $region32: #{_cbam_forward_impl.1} parent=5 // pred_fallthru
      _
    %p186 = scmp.le.s32.totalorder 1, %s11
    %p187 = scmp.lt.s32.totalorder %s11, 3
    %p188 = pnand %p186, %p187
    %p189 = pneg %p188
    // Predicated region
    $region37: #{_cbam_forward_impl.1} parent=5 // pred_check
      _
    $region38: #{_cbam_forward_impl.1} parent=5 // pred_check_branch
      %191 = sbr.rel (%p188) target = $region40
    $region39: #{_cbam_forward_impl.1} parent=5 // pred_region
      %s192 = ssub.s32 %s11, 1
      %p193 = scmp.lt.s32.totalorder %s16, 1
      %s194 = scalar_select %p193, %s16, 1
      %s195 = smul.addr %s194, 8
      %s196 = smul.addr %s195, 8
      %s197 = scalar_lea.vmem %s0, %s196
      %p198 = pneg %p37
      %p199 = pneg %p34
      %p200 = pneg %p58
      %p201 = pneg %p55
      %p202 = pneg %p79
      %p203 = pneg %p76
      %p204 = pneg %p100
      %p205 = pneg %p97
      %p206 = pneg %p121
      %p207 = pneg %p118
      %p208 = pneg %p147
      %p209 = pneg %p144
      %p210 = scmp.lt.s32.totalorder %s16, 1
      %s211 = scalar_select %p210, %s16, 1
      %s212 = smul.addr %s211, 8
      %s213 = smul.addr %s212, 8
      %s214 = scalar_lea.vmem %s5, %s213
      %p215 = scmp.lt.s32.totalorder %s16, 1
      %s216 = scalar_select %p215, %s16, 1
      %s217 = smul.addr %s216, 8
      %s218 = smul.addr %s217, 8
      %s219 = scalar_lea.vmem %s0, %s218
      %p220 = scmp.lt.s32.totalorder %s16, 1
      %s221 = scalar_select %p220, %s16, 1
      %s222 = smul.addr %s221, 8
      %s223 = smul.addr %s222, 8
      %s224 = scalar_lea.vmem %s5, %s223
      %v225 = vld [vmem:[%s219] sm:$0xff]
      %v226 = vld [vmem:[%s219 + $0x8] sm:$0xff]
      %v227 = vld [vmem:[%s219 + $0x10] sm:$0xff]
      %v228 = vld [vmem:[%s219 + $0x18] sm:$0xff]
      %v229 = vld [vmem:[%s219 + $0x20] sm:$0xff]
      %v230 = vld [vmem:[%s219 + $0x28] sm:$0xff]
      %v231 = vld [vmem:[%s219 + $0x30] sm:$0xff]
      %v232 = vld [vmem:[%s219 + $0x38] sm:$0xff]
      %vm233 = vcmask 523264
      %v234 = vsel %vm233, %v225, 0.0
      %235 = vadd.xlane.f32.xlu0 %v234
      %v236 = vpop.xlane.xlu0 %235
      %v237 = vsel %vm233, %v226, 0.0
      %238 = vadd.xlane.f32.xlu0 %v237
      %v239 = vpop.xlane.xlu0 %238
      %v240 = vsel %vm233, %v227, 0.0
      %241 = vadd.xlane.f32.xlu0 %v240
      %v242 = vpop.xlane.xlu0 %241
      %v243 = vsel %vm233, %v228, 0.0
      %244 = vadd.xlane.f32.xlu0 %v243
      %v245 = vpop.xlane.xlu0 %244
      %v246 = vsel %vm233, %v229, 0.0
      %247 = vadd.xlane.f32.xlu0 %v246
      %v248 = vpop.xlane.xlu0 %247
      %v249 = vsel %vm233, %v230, 0.0
      %250 = vadd.xlane.f32.xlu0 %v249
      %v251 = vpop.xlane.xlu0 %250
      %v252 = vsel %vm233, %v231, 0.0
      %253 = vadd.xlane.f32.xlu0 %v252
      %v254 = vpop.xlane.xlu0 %253
      %v255 = vsel %vm233, %v232, 0.0
      %256 = vadd.xlane.f32.xlu0 %v255
      %v257 = vpop.xlane.xlu0 %256
      %v258 = vmul.f32 %v236, 0.015625
      %v259 = vmul.f32 %v239, 0.015625
      %v260 = vmul.f32 %v242, 0.015625
      %v261 = vmul.f32 %v245, 0.015625
      %v262 = vmul.f32 %v248, 0.015625
      %v263 = vmul.f32 %v251, 0.015625
      %v264 = vmul.f32 %v254, 0.015625
      %v265 = vmul.f32 %v257, 0.015625
      %v274 = vlaneseq
      %v275 = vand.u32 %v274, 127
      %v276 = vlaneseq
      %v277 = vshrl.u32 %v276, 7
      %v278 = vsub.s32 %v275, %v277
      %v279 = vrot.slane %v258, %v278
      %v280 = vadd.s32 %v275, 4294967288
      %v281 = vlaneseq
      %v282 = vshrl.u32 %v281, 7
      %v283 = vsub.s32 %v280, %v282
      %v284 = vrot.slane %v259, %v283
      %vm285 = vcmask 130112
      %v286 = vsel %vm285, %v284, %v279
      %v287 = vadd.s32 %v275, 4294967280
      %v288 = vlaneseq
      %v289 = vshrl.u32 %v288, 7
      %v290 = vsub.s32 %v287, %v289
      %v291 = vrot.slane %v260, %v290
      %vm292 = vcmask 195712
      %v293 = vsel %vm292, %v291, %v286
      %v294 = vadd.s32 %v275, 4294967272
      %v295 = vlaneseq
      %v296 = vshrl.u32 %v295, 7
      %v297 = vsub.s32 %v294, %v296
      %v298 = vrot.slane %v261, %v297
      %vm299 = vcmask 261312
      %v300 = vsel %vm299, %v298, %v293
      %v301 = vadd.s32 %v275, 4294967264
      %v302 = vlaneseq
      %v303 = vshrl.u32 %v302, 7
      %v304 = vsub.s32 %v301, %v303
      %v305 = vrot.slane %v262, %v304
      %vm306 = vcmask 326912
      %v307 = vsel %vm306, %v305, %v300
      %v308 = vadd.s32 %v275, 4294967256
      %v309 = vlaneseq
      %v310 = vshrl.u32 %v309, 7
      %v311 = vsub.s32 %v308, %v310
      %v312 = vrot.slane %v263, %v311
      %vm313 = vcmask 392512
      %v314 = vsel %vm313, %v312, %v307
      %v315 = vadd.s32 %v275, 4294967248
      %v316 = vlaneseq
      %v317 = vshrl.u32 %v316, 7
      %v318 = vsub.s32 %v315, %v317
      %v319 = vrot.slane %v264, %v318
      %vm320 = vcmask 458112
      %v321 = vsel %vm320, %v319, %v314
      %v322 = vadd.s32 %v275, 4294967240
      %v323 = vlaneseq
      %v324 = vshrl.u32 %v323, 7
      %v325 = vsub.s32 %v322, %v324
      %v326 = vrot.slane %v265, %v325
      %vm327 = vcmask 523712
      %v328 = vsel %vm327, %v326, %v321
      %vm330 = vcmask 516096
      %331 = vst.msk [vmem:[#allocation2] sm:$0x1] %vm330, %v328
      %v332 = vsel %vm233, %v225, -inf
      %333 = vmax.xlane.f32.xlu0 %v332
      %v334 = vpop.xlane.xlu0 %333
      %v335 = vsel %vm233, %v226, -inf
      %336 = vmax.xlane.f32.xlu0 %v335
      %v337 = vpop.xlane.xlu0 %336
      %v338 = vsel %vm233, %v227, -inf
      %339 = vmax.xlane.f32.xlu0 %v338
      %v340 = vpop.xlane.xlu0 %339
      %v341 = vsel %vm233, %v228, -inf
      %342 = vmax.xlane.f32.xlu0 %v341
      %v343 = vpop.xlane.xlu0 %342
      %v344 = vsel %vm233, %v229, -inf
      %345 = vmax.xlane.f32.xlu0 %v344
      %v346 = vpop.xlane.xlu0 %345
      %v347 = vsel %vm233, %v230, -inf
      %348 = vmax.xlane.f32.xlu0 %v347
      %v349 = vpop.xlane.xlu0 %348
      %v350 = vsel %vm233, %v231, -inf
      %351 = vmax.xlane.f32.xlu0 %v350
      %v352 = vpop.xlane.xlu0 %351
      %v353 = vsel %vm233, %v232, -inf
      %354 = vmax.xlane.f32.xlu0 %v353
      %v355 = vpop.xlane.xlu0 %354
      %v364 = vlaneseq
      %v365 = vshrl.u32 %v364, 7
      %v366 = vsub.s32 %v275, %v365
      %v367 = vrot.slane %v334, %v366
      %v368 = vlaneseq
      %v369 = vshrl.u32 %v368, 7
      %v370 = vsub.s32 %v280, %v369
      %v371 = vrot.slane %v337, %v370
      %v372 = vsel %vm285, %v371, %v367
      %v373 = vlaneseq
      %v374 = vshrl.u32 %v373, 7
      %v375 = vsub.s32 %v287, %v374
      %v376 = vrot.slane %v340, %v375
      %v377 = vsel %vm292, %v376, %v372
      %v378 = vlaneseq
      %v379 = vshrl.u32 %v378, 7
      %v380 = vsub.s32 %v294, %v379
      %v381 = vrot.slane %v343, %v380
      %v382 = vsel %vm299, %v381, %v377
      %v383 = vlaneseq
      %v384 = vshrl.u32 %v383, 7
      %v385 = vsub.s32 %v301, %v384
      %v386 = vrot.slane %v346, %v385
      %v387 = vsel %vm306, %v386, %v382
      %v388 = vlaneseq
      %v389 = vshrl.u32 %v388, 7
      %v390 = vsub.s32 %v308, %v389
      %v391 = vrot.slane %v349, %v390
      %v392 = vsel %vm313, %v391, %v387
      %v393 = vlaneseq
      %v394 = vshrl.u32 %v393, 7
      %v395 = vsub.s32 %v315, %v394
      %v396 = vrot.slane %v352, %v395
      %v397 = vsel %vm320, %v396, %v392
      %v398 = vlaneseq
      %v399 = vshrl.u32 %v398, 7
      %v400 = vsub.s32 %v322, %v399
      %v401 = vrot.slane %v355, %v400
      %v402 = vsel %vm327, %v401, %v397
      %404 = vst.msk [vmem:[#allocation2 + $0x1] sm:$0x1] %vm330, %v402
      %v405 = vld [vmem:[#allocation2] sm:$0x3]
      %v406 = vld [vmem:[%s1] sm:$0xff]
      %v407 = vld [vmem:[%s1 + $0x8] sm:$0xff]
      %v408 = vld [vmem:[%s1 + $0x10] sm:$0xff]
      %v409 = vld [vmem:[%s1 + $0x18] sm:$0xff]
      %v410 = vld [vmem:[%s1 + $0x20] sm:$0xff]
      %v411 = vld [vmem:[%s1 + $0x28] sm:$0xff]
      %v412 = vld [vmem:[%s1 + $0x30] sm:$0xff]
      %v413 = vld [vmem:[%s1 + $0x38] sm:$0xff]
      %v414 = vld [vmem:[%s2] sm:$0x1]
      %v415 = vld [vmem:[%s3] sm:$0xf]
      %v416 = vld [vmem:[%s4] sm:$0x1]
      %v418 = vlaneseq
      %v419 = vshrl.u32 %v418, 7
      %v420 = vsub.s32 0, %v419
      %v421 = vrot.slane %v414, %v420
      %v424 = vsel %vm233, %v405, 0
      %426 = vmatprep.subr.mxu0 0.0
      %427 = vmatpush1.msra.mxu0 %v406
      %428 = vmatprep.subr.mxu0 0.0
      %429 = vmatpush1.msra.mxu0 %v407
      %430 = vmatprep.subr.mxu0 0.0
      %431 = vmatpush1.msra.mxu0 %v408
      %432 = vmatprep.subr.mxu0 0.0
      %433 = vmatpush1.msra.mxu0 %v409
      %434 = vmatprep.subr.mxu0 0.0
      %435 = vmatpush1.msra.mxu0 %v410
      %436 = vmatprep.subr.mxu0 0.0
      %437 = vmatpush1.msra.mxu0 %v411
      %438 = vmatprep.subr.mxu0 0.0
      %439 = vmatpush1.msra.mxu0 %v412
      %440 = vmatprep.subr.mxu0 0.0
      %441 = vmatpush1.msra.mxu0 %v413
      %442 = vmatprep.subr.mxu0 0.0
      %443 = vmatpush1.msra.mxu0 0.0
      %444 = vmatprep.subr.mxu0 0.0
      %445 = vmatpush1.msra.mxu0 0.0
      %446 = vmatprep.subr.mxu0 0.0
      %447 = vmatpush1.msra.mxu0 0.0
      %448 = vmatprep.subr.mxu0 0.0
      %449 = vmatpush1.msra.mxu0 0.0
      %450 = vmatprep.subr.mxu0 0.0
      %451 = vmatpush1.msra.mxu0 0.0
      %452 = vmatprep.subr.mxu0 0.0
      %453 = vmatpush1.msra.mxu0 0.0
      %454 = vmatprep.subr.mxu0 0.0
      %455 = vmatpush1.msra.mxu0 0.0
      %456 = vmatprep.subr.mxu0 0.0
      %457 = vmatpush1.msra.mxu0 0.0
      %458 = vmatprep.subr.mxu0 0.0
      %459 = vmatpush1.msra.mxu0 0.0
      %460 = vmatprep.subr.mxu0 0.0
      %461 = vmatpush1.msra.mxu0 0.0
      %462 = vmatprep.subr.mxu0 0.0
      %463 = vmatpush1.msra.mxu0 0.0
      %464 = vmatprep.subr.mxu0 0.0
      %465 = vmatpush1.msra.mxu0 0.0
      %466 = vmatprep.subr.mxu0 0.0
      %467 = vmatpush1.msra.mxu0 0.0
      %468 = vmatprep.subr.mxu0 0.0
      %469 = vmatpush1.msra.mxu0 0.0
      %470 = vmatprep.subr.mxu0 0.0
      %471 = vmatpush1.msra.mxu0 0.0
      %472 = vmatprep.subr.mxu0 0.0
      %473 = vmatpush1.msra.mxu0 0.0
      %474 = vmatprep.subr.mxu0 0.0
      %475 = vmatpush1.msra.mxu0 0.0
      %476 = vmatprep.subr.mxu0 0.0
      %477 = vmatpush1.msra.mxu0 0.0
      %478 = vmatprep.subr.mxu0 0.0
      %479 = vmatpush1.msra.mxu0 0.0
      %480 = vmatprep.subr.mxu0 0.0
      %481 = vmatpush1.msra.mxu0 0.0
      %482 = vmatprep.subr.mxu0 0.0
      %483 = vmatpush1.msra.mxu0 0.0
      %484 = vmatprep.subr.mxu0 0.0
      %485 = vmatpush1.msra.mxu0 0.0
      %486 = vmatprep.subr.mxu0 0.0
      %487 = vmatpush1.msra.mxu0 0.0
      %488 = vmatprep.subr.mxu0 0.0
      %489 = vmatpush1.msra.mxu0 0.0
      %490 = vmatprep.mubr.f32.mxu0 0.0
      %491 = vmatmul.mubr.f32.gmra.mrb[0].mxu0 %v424
      %v492 = vpop.f32.mrb[0].mxu0
      %v493 = vadd.f32 %v421, %v492
      %v494 = vpop.f32.mrb[0].mxu0
      %495 = vdwg.mxu0
      %v496 = vmul.f32 %v493, 0.5
      %v497 = vmul.f32 %v493, 0.70710677
      %v498 = verf.f32.pop %v497
      %v499 = vadd.f32 %v498, 1.0
      %v500 = vmul.f32 %v496, %v499
      %v502 = vlaneseq
      %v503 = vshrl.u32 %v502, 7
      %v504 = vsub.s32 0, %v503
      %v505 = vrot.slane %v416, %v504
      %vm507 = vcmask 31744
      %v509 = vsel %vm507, %v500, 0
      %vm511 = vcmask 1043456
      %v513 = vsel %vm511, %v415, 0
      %515 = vmatprep.subr.mxu0 0.0
      %516 = vmatpush1.msra.mxu0 %v513
      %517 = vmatprep.subr.mxu0 0.0
      %518 = vmatpush1.msra.mxu0 0.0
      %519 = vmatprep.subr.mxu0 0.0
      %520 = vmatpush1.msra.mxu0 0.0
      %521 = vmatprep.subr.mxu0 0.0
      %522 = vmatpush1.msra.mxu0 0.0
      %523 = vmatprep.subr.mxu0 0.0
      %524 = vmatpush1.msra.mxu0 0.0
      %525 = vmatprep.subr.mxu0 0.0
      %526 = vmatpush1.msra.mxu0 0.0
      %527 = vmatprep.subr.mxu0 0.0
      %528 = vmatpush1.msra.mxu0 0.0
      %529 = vmatprep.subr.mxu0 0.0
      %530 = vmatpush1.msra.mxu0 0.0
      %531 = vmatprep.subr.mxu0 0.0
      %532 = vmatpush1.msra.mxu0 0.0
      %533 = vmatprep.subr.mxu0 0.0
      %534 = vmatpush1.msra.mxu0 0.0
      %535 = vmatprep.subr.mxu0 0.0
      %536 = vmatpush1.msra.mxu0 0.0
      %537 = vmatprep.subr.mxu0 0.0
      %538 = vmatpush1.msra.mxu0 0.0
      %539 = vmatprep.subr.mxu0 0.0
      %540 = vmatpush1.msra.mxu0 0.0
      %541 = vmatprep.subr.mxu0 0.0
      %542 = vmatpush1.msra.mxu0 0.0
      %543 = vmatprep.subr.mxu0 0.0
      %544 = vmatpush1.msra.mxu0 0.0
      %545 = vmatprep.subr.mxu0 0.0
      %546 = vmatpush1.msra.mxu0 0.0
      %547 = vmatprep.subr.mxu0 0.0
      %548 = vmatpush1.msra.mxu0 0.0
      %549 = vmatprep.subr.mxu0 0.0
      %550 = vmatpush1.msra.mxu0 0.0
      %551 = vmatprep.subr.mxu0 0.0
      %552 = vmatpush1.msra.mxu0 0.0
      %553 = vmatprep.subr.mxu0 0.0
      %554 = vmatpush1.msra.mxu0 0.0
      %555 = vmatprep.subr.mxu0 0.0
      %556 = vmatpush1.msra.mxu0 0.0
      %557 = vmatprep.subr.mxu0 0.0
      %558 = vmatpush1.msra.mxu0 0.0
      %559 = vmatprep.subr.mxu0 0.0
      %560 = vmatpush1.msra.mxu0 0.0
      %561 = vmatprep.subr.mxu0 0.0
      %562 = vmatpush1.msra.mxu0 0.0
      %563 = vmatprep.subr.mxu0 0.0
      %564 = vmatpush1.msra.mxu0 0.0
      %565 = vmatprep.subr.mxu0 0.0
      %566 = vmatpush1.msra.mxu0 0.0
      %567 = vmatprep.subr.mxu0 0.0
      %568 = vmatpush1.msra.mxu0 0.0
      %569 = vmatprep.subr.mxu0 0.0
      %570 = vmatpush1.msra.mxu0 0.0
      %571 = vmatprep.subr.mxu0 0.0
      %572 = vmatpush1.msra.mxu0 0.0
      %573 = vmatprep.subr.mxu0 0.0
      %574 = vmatpush1.msra.mxu0 0.0
      %575 = vmatprep.subr.mxu0 0.0
      %576 = vmatpush1.msra.mxu0 0.0
      %577 = vmatprep.subr.mxu0 0.0
      %578 = vmatpush1.msra.mxu0 0.0
      %579 = vmatprep.mubr.f32.mxu0 0.0
      %580 = vmatmul.mubr.f32.gmra.mrb[0].mxu0 %v509
      %v581 = vpop.f32.mrb[0].mxu0
      %v582 = vadd.f32 %v505, %v581
      %v583 = vpop.f32.mrb[0].mxu0
      %584 = vdwg.mxu0
      %v586 = vrot.slane %v582, 1
      %v588 = vadd.f32 %v582, %v586
      %v589 = vxor.u32 %v588, 2147483648
      %v590 = vmul.f32 %v589, 1.442695
      %v591 = vpow.pop %v590
      %v592 = vadd.f32 %v591, 1.0
      %v593 = vrcp.pop %v592
      %v594 = vmul.f32 1.0, %v593
      %v595 = vlaneseq
      %v596 = vshrl.u32 %v595, 7
      %v597 = vsub.s32 0, %v596
      %v598 = vrot.slane %v594, %v597
      %600 = vbcast.lane.b32.xlu0 %v598, 256
      %v601 = vpop.permute.xlu0 %600
      %s603 = sor.u32 256, 8
      %604 = vbcast.lane.b32.xlu0 %v598, %s603
      %v605 = vpop.permute.xlu0 %604
      %s607 = sor.u32 256, 16
      %608 = vbcast.lane.b32.xlu0 %v598, %s607
      %v609 = vpop.permute.xlu0 %608
      %s611 = sor.u32 256, 24
      %612 = vbcast.lane.b32.xlu0 %v598, %s611
      %v613 = vpop.permute.xlu0 %612
      %s615 = sor.u32 256, 32
      %616 = vbcast.lane.b32.xlu0 %v598, %s615
      %v617 = vpop.permute.xlu0 %616
      %s619 = sor.u32 256, 40
      %620 = vbcast.lane.b32.xlu0 %v598, %s619
      %v621 = vpop.permute.xlu0 %620
      %s623 = sor.u32 256, 48
      %624 = vbcast.lane.b32.xlu0 %v598, %s623
      %v625 = vpop.permute.xlu0 %624
      %s627 = sor.u32 256, 56
      %628 = vbcast.lane.b32.xlu0 %v598, %s627
      %v629 = vpop.permute.xlu0 %628
      %v630 = vmul.f32 %v225, %v601
      %v631 = vmul.f32 %v226, %v605
      %v632 = vmul.f32 %v227, %v609
      %v633 = vmul.f32 %v228, %v613
      %v634 = vmul.f32 %v229, %v617
      %v635 = vmul.f32 %v230, %v621
      %v636 = vmul.f32 %v231, %v625
      %v637 = vmul.f32 %v232, %v629
      %638 = vst.msk [vmem:[%s224] sm:$0xff] %vm233, %v630
      %639 = vst.msk [vmem:[%s224 + $0x8] sm:$0xff] %vm233, %v631
      %640 = vst.msk [vmem:[%s224 + $0x10] sm:$0xff] %vm233, %v632
      %641 = vst.msk [vmem:[%s224 + $0x18] sm:$0xff] %vm233, %v633
      %642 = vst.msk [vmem:[%s224 + $0x20] sm:$0xff] %vm233, %v634
      %643 = vst.msk [vmem:[%s224 + $0x28] sm:$0xff] %vm233, %v635
      %644 = vst.msk [vmem:[%s224 + $0x30] sm:$0xff] %vm233, %v636
      %645 = vst.msk [vmem:[%s224 + $0x38] sm:$0xff] %vm233, %v637
      %p646 = scmp.lt.s32.totalorder %s16, 1
      %s647 = scalar_select %p646, %s16, 1
      %s648 = smul.addr %s647, 8
      %s649 = smul.addr %s648, 8
      %s650 = scalar_lea.vmem %s5, %s649
      // Predicated region
      $region41: #{_cbam_forward_impl.1} parent=39 // pred_check
        %p651 = pneg %p144
      $region42: #{_cbam_forward_impl.1} parent=39 // pred_check_branch
        %653 = sbr.rel (%p651) target = $region44
      $region43: #{_cbam_forward_impl.1} parent=39 // pred_region
        _
      $region44: #{_cbam_forward_impl.1} parent=39 // pred_fallthru
        _
    $region40: #{_cbam_forward_impl.1} parent=5 // pred_fallthru
      _
    %p654 = scmp.le.s32.totalorder 2, %s11
    // Predicated region
    $region45: #{_cbam_forward_impl.1} parent=5 // pred_check
      %p655 = pneg %p654
    $region46: #{_cbam_forward_impl.1} parent=5 // pred_check_branch
      %657 = sbr.rel (%p655) target = $region48
    $region47: #{_cbam_forward_impl.1} parent=5 // pred_region
      %s658 = ssub.s32 %s11, 2
      // Predicated region
      $region49: #{_cbam_forward_impl.1} parent=47 // pred_check
        %p659 = pneg %p150
      $region50: #{_cbam_forward_impl.1} parent=47 // pred_check_branch
        %661 = sbr.rel (%p659) target = $region52
      $region51: #{_cbam_forward_impl.1} parent=47 // pred_region
        %p662 = scmp.lt.s32.totalorder %s17, 1
        %s663 = scalar_select %p662, %s17, 1
        %s664 = smul.addr %s663, 8
        %s665 = smul.addr %s664, 8
        %s666 = scalar_lea.vmem %s5, %s665
      $region52: #{_cbam_forward_impl.1} parent=47 // pred_fallthru
        _
    $region48: #{_cbam_forward_impl.1} parent=5 // pred_fallthru
      _
  $region6: #{_cbam_forward_impl.1} parent=0 // loop_footer
    %s15 = sadd.s32 1, %s11
  $region7: #{_cbam_forward_impl.1} parent=0 // loop_footer_branch
    %10 = sbr.rel target = $region3
  $region8: #{_cbam_forward_impl.1} parent=0 // loop_exit
    _

</llo_original>
